<compile_context>
chip_gen: v5e
topology: v5e:2x2
jax: 0.10.0
libtpu: 0.0.40
codegen_flags: <defaults>
</compile_context>

<pallas_src>
import functools

import jax
import jax.numpy as jnp
from jax import lax
from jax.experimental import pallas as pl
from jax.experimental.pallas import tpu as pltpu


def reid_head_kernel(x_ref, w_red_ref, w_fc_ref, b_fc_ref,
                     feats_ref, cls_ref, acc_ref, *, inv_hw):
    """One (batch-tile, hw-tile) grid step.

    x_ref     : [bt, C, hw_t]  backbone feature slab (C on sublanes, HW on lanes)
    w_red_ref : [C, Fp]        1x1 reduction conv weight (F lane-padded)
    w_fc_ref  : [Fp, NCp]      BN-folded fc weight (NC lane-padded)
    b_fc_ref  : [1, NCp]       BN-folded fc bias
    feats_ref : [bt, Fp]       pooled embedding output
    cls_ref   : [bt, NCp]      classifier logits output
    acc_ref   : [bt, C] f32    running spatial sum (VMEM scratch)
    """
    k = pl.program_id(1)

    @pl.when(k == 0)
    def _init():
        acc_ref[...] = jnp.zeros_like(acc_ref)

    # Streaming spatial sum over the lane axis (XLU reduce), f32 accumulation.
    acc_ref[...] += jnp.sum(x_ref[...].astype(jnp.float32), axis=-1)

    @pl.when(k == pl.num_programs(1) - 1)
    def _finalize():
        # AdaptiveAvgPool2d(1): divide once by the true H*W.
        pooled = acc_ref[...] * inv_hw                                  # [bt, C]
        # reduction 1x1 conv == matmul on the MXU (pool-first is exact).
        feats = jnp.dot(pooled, w_red_ref[...],
                        preferred_element_type=jnp.float32)             # [bt, Fp]
        feats_ref[...] = feats.astype(feats_ref.dtype)
        # (folded) BatchNorm + 1x1-conv fc + Flatten.
        cls = jnp.dot(feats, w_fc_ref[...],
                      preferred_element_type=jnp.float32) + b_fc_ref[...]
        cls_ref[...] = cls.astype(cls_ref.dtype)


def _round_up(n, m):
    return ((n + m - 1) // m) * m


def _largest_divisor_tile(n, unit, cap):
    """Largest multiple of `unit` that divides n and is <= cap; full n if no fit."""
    if n % unit != 0:
        return n
    cap = max(unit, (min(cap, n) // unit) * unit)
    t = cap
    while t >= unit:
        if n % t == 0:
            return t
        t -= unit
    return n


def _fold_bn_into_fc(gamma, beta, mean, var, w_fc, b_fc, eps=1e-5):
    """Fold eval-mode BatchNorm2d into the following 1x1-conv fc."""
    scale = gamma * lax.rsqrt(var + eps)            # [1, F]
    w_fc_f = scale.reshape(-1, 1) * w_fc            # [F, NC]
    b_fc_f = b_fc + (beta - mean * scale) @ w_fc    # [1, NC]
    return w_fc_f, b_fc_f


def reid_forward(x_nchw, params, *, use_bf16=False, max_hw_tile=8192,
                 max_b_tile=64, vmem_budget_bytes=24 * 1024 * 1024):
    B, C, H, W = x_nchw.shape
    HW = H * W
    F = params["w_red"].shape[1]
    NC = params["w_fc"].shape[1]

    # NCHW -> [B, C, HW]: pure reshape, no extra HBM transpose pass.
    x = x_nchw.reshape(B, C, HW)
    if use_bf16:
        # v6e/v7x bandwidth knob for the dominant x stream (accum stays f32).
        x = x.astype(jnp.bfloat16)
    itemsize = x.dtype.itemsize

    # Fold eval-mode BatchNorm2d (eps=1e-5) into the fc weight/bias once.
    w_fc_f, b_fc_f = _fold_bn_into_fc(params["gamma"], params["beta"],
                                      params["mean"], params["var"],
                                      params["w_fc"], params["b_fc"])

    # Lane-dense (multiple-of-128) output widths; zero-pad weights to match and
    # slice the padding off after the call (zero pad rows/cols keep results exact).
    Fp = _round_up(F, 128)
    NCp = _round_up(NC, 128)
    w_red_p = jnp.zeros((C, Fp), jnp.float32).at[:, :F].set(
        params["w_red"].astype(jnp.float32))
    w_fc_p = jnp.zeros((Fp, NCp), jnp.float32).at[:F, :NC].set(w_fc_f)
    b_fc_p = jnp.zeros((1, NCp), jnp.float32).at[:, :NC].set(b_fc_f)

    # ---- Tile selection (VMEM-budget aware, (8,128) rule respected) ----
    bt = _largest_divisor_tile(B, 8, max_b_tile) if B % 8 == 0 else B
    # Bytes that do not scale with the HW tile (resident weights are still
    # double-buffered by the pipeline, outputs too) + f32 accumulator scratch.
    fixed = 2 * (C * Fp + Fp * NCp + NCp) * 4
    fixed += 2 * bt * (Fp + NCp) * 4
    fixed += bt * C * 4
    x_budget = max(vmem_budget_bytes - fixed, 2 * bt * C * 128 * itemsize)
    hw_cap = max(128, x_budget // (2 * bt * C * itemsize))
    if HW % 128 == 0:
        hw_t = _largest_divisor_tile(HW, 128, min(hw_cap, max_hw_tile))
    else:
        hw_t = HW
    grid = (B // bt, HW // hw_t)

    est_total = fixed + 2 * bt * C * hw_t * itemsize
    vmem_limit = int(min(48 * 1024 * 1024,
                         max(32 * 1024 * 1024, est_total + (2 << 20))))

    kernel = functools.partial(reid_head_kernel, inv_hw=1.0 / float(HW))

    feats_p, cls_p = pl.pallas_call(
        kernel,
        out_shape=(
            jax.ShapeDtypeStruct((B, Fp), jnp.float32),
            jax.ShapeDtypeStruct((B, NCp), jnp.float32),
        ),
        grid=grid,
        in_specs=[
            pl.BlockSpec((bt, C, hw_t), lambda b, k: (b, 0, k)),   # x: streamed
            pl.BlockSpec((C, Fp), lambda b, k: (0, 0)),            # w_red: resident
            pl.BlockSpec((Fp, NCp), lambda b, k: (0, 0)),          # w_fc': resident
            pl.BlockSpec((1, NCp), lambda b, k: (0, 0)),           # b_fc': resident
        ],
        out_specs=(
            pl.BlockSpec((bt, Fp), lambda b, k: (b, 0)),
            pl.BlockSpec((bt, NCp), lambda b, k: (b, 0)),
        ),
        scratch_shapes=[pltpu.VMEM((bt, C), jnp.float32)],
        compiler_params=pltpu.CompilerParams(
            # batch tiles independent (shards across TCs on v7x); HW is the
            # reduction axis -> "arbitrary", placed last in the grid.
            dimension_semantics=("parallel", "arbitrary"),
            vmem_limit_bytes=vmem_limit,
        ),
    )(x, w_red_p, w_fc_p, b_fc_p)

    return {"feats": feats_p[:, :F], "cls": cls_p[:, :NC]}


def reference_forward(x_nchw, params):
    """Pure-JAX reference matching PyTorch ReidModel.forward (eval-mode BN)."""
    B, C, H, W = x_nchw.shape
    x = jnp.transpose(x_nchw, (0, 2, 3, 1)).reshape(B, H * W, C)
    z = jnp.einsum("bsc,cf->bsf", x, params["w_red"])       # 1x1 reduction conv
    pooled = jnp.mean(z, axis=1)                             # AdaptiveAvgPool2d(1)
    inv_std = 1.0 / jnp.sqrt(params["var"] + 1e-5)
    bn = (pooled - params["mean"]) * inv_std * params["gamma"] + params["beta"]
    cls = bn @ params["w_fc"] + params["b_fc"]               # 1x1-conv fc + Flatten
    return {"feats": pooled, "cls": cls}


def make_params(c_in, feat_dim, num_classes):
    k = jax.random.PRNGKey(0)
    k_red, k_fc, k_b = jax.random.split(k, 3)
    return {
        # reduction Conv2d(C_in, feat_dim, 1, bias=False): weight [F,C,1,1] -> [C,F]
        "w_red": 0.05 * jax.random.normal(k_red, (c_in, feat_dim), jnp.float32),
        # BatchNorm2d(feat_dim) running stats / affine (eval mode)
        "gamma": jnp.ones((1, feat_dim), jnp.float32),
        "beta": jnp.zeros((1, feat_dim), jnp.float32),
        "mean": jnp.zeros((1, feat_dim), jnp.float32),
        "var": jnp.ones((1, feat_dim), jnp.float32),
        # fc (use_conv=True): Conv2d(feat_dim, num_classes, 1): weight [NC,F,1,1] -> [F,NC]
        "w_fc": 0.05 * jax.random.normal(k_fc, (feat_dim, num_classes), jnp.float32),
        "b_fc": 0.01 * jax.random.normal(k_b, (1, num_classes), jnp.float32),
    }


if __name__ == "__main__":
    B, C_in, H, W = 2, 32, 16, 16    # C_in plays the role of num_pooled_features
    feat_dim, num_classes = 16, 8

    key = jax.random.PRNGKey(0)
    x = jax.random.normal(key, (B, C_in, H, W), jnp.float32)
    params = make_params(C_in, feat_dim, num_classes)

    # max_hw_tile=128 forces a 2-step HW reduction at HW=256 so the
    # accumulate/finalize grid path is exercised even at toy shapes.
    out = reid_forward(x, params, max_hw_tile=128)
    jax.block_until_ready(out)

    ref = reference_forward(x, params)
    assert out["feats"].shape == (B, feat_dim)
    assert out["cls"].shape == (B, num_classes)
    assert jnp.allclose(out["feats"], ref["feats"], atol=1e-4, rtol=1e-4)
    assert jnp.allclose(out["cls"], ref["cls"], atol=1e-4, rtol=1e-4)

    # bf16-stream bandwidth knob (f32 accumulation inside the kernel).
    out_bf16 = reid_forward(x, params, use_bf16=True)
    jax.block_until_ready(out_bf16)
    assert jnp.allclose(out_bf16["feats"], ref["feats"], atol=5e-2, rtol=5e-2)
    assert jnp.allclose(out_bf16["cls"], ref["cls"], atol=5e-2, rtol=5e-2)

    print("KERNEL_OK")
</pallas_src>

<mosaic_0001>
module attributes {stable_mosaic.version = 11 : i64} {
  func.func @reid_head_kernel(%arg0: i32, %arg1: i32, %arg2: memref<2x32x128xf32, #tpu.memory_space<vmem>>, %arg3: memref<32x128xf32, #tpu.memory_space<vmem>>, %arg4: memref<128x128xf32, #tpu.memory_space<vmem>>, %arg5: memref<1x128xf32, #tpu.memory_space<vmem>>, %arg6: memref<2x128xf32, #tpu.memory_space<vmem>>, %arg7: memref<2x128xf32, #tpu.memory_space<vmem>>, %arg8: memref<2x32xf32, #tpu.memory_space<vmem>>) attributes {dimension_semantics = [#tpu.dimension_semantics<parallel>, #tpu.dimension_semantics<arbitrary>], iteration_bounds = array<i64: 1, 2>, scalar_prefetch = 0 : i64, scratch_operands = 1 : i64, tpu.core_type = #tpu.core_type<tc>, window_params = [{transform_indices = @transform_0, window_bounds = array<i64: 2, 32, 128>}, {pipeline_mode = #tpu.pipeline_mode<synchronous>, transform_indices = @transform_1, window_bounds = array<i64: 32, 128>}, {pipeline_mode = #tpu.pipeline_mode<synchronous>, transform_indices = @transform_2, window_bounds = array<i64: 128, 128>}, {pipeline_mode = #tpu.pipeline_mode<synchronous>, transform_indices = @transform_3, window_bounds = array<i64: 1, 128>}, {transform_indices = @transform_4, window_bounds = array<i64: 2, 128>}, {transform_indices = @transform_5, window_bounds = array<i64: 2, 128>}]} {
    %c0_i32 = arith.constant 0 : i32
    %0 = arith.cmpi eq, %arg1, %c0_i32 : i32
    %1 = arith.extui %0 : i1 to i32
    %c0_i32_0 = arith.constant 0 : i32
    %2 = arith.cmpi ne, %1, %c0_i32_0 : i32
    scf.if %2 {
      %cst_8 = arith.constant 0.000000e+00 : f32
      %11 = vector.broadcast %cst_8 : f32 to vector<2x32xf32>
      %c0_9 = arith.constant 0 : index
      %c0_10 = arith.constant 0 : index
      %12 = vector.load %arg8[%c0_9, %c0_10] : memref<2x32xf32, #tpu.memory_space<vmem>>, vector<2x32xf32>
      tpu.vector_store %arg8[%c0_9, %c0_10], %11 {strides = array<i32>} : memref<2x32xf32, #tpu.memory_space<vmem>>, vector<2x32xf32>,
    } else {
    }
    %c0 = arith.constant 0 : index
    %c0_1 = arith.constant 0 : index
    %3 = vector.load %arg8[%c0, %c0_1] : memref<2x32xf32, #tpu.memory_space<vmem>>, vector<2x32xf32>
    %c0_2 = arith.constant 0 : index
    %c0_3 = arith.constant 0 : index
    %c0_4 = arith.constant 0 : index
    %4 = vector.load %arg2[%c0_2, %c0_3, %c0_4] : memref<2x32x128xf32, #tpu.memory_space<vmem>>, vector<2x32x128xf32>
    %cst = arith.constant dense<0.000000e+00> : vector<2x32xf32>
    %5 = vector.multi_reduction <add>, %4, %cst [2] : vector<2x32x128xf32> to vector<2x32xf32>
    %6 = arith.addf %3, %5 : vector<2x32xf32>
    %c0_5 = arith.constant 0 : index
    %c0_6 = arith.constant 0 : index
    %7 = vector.load %arg8[%c0_5, %c0_6] : memref<2x32xf32, #tpu.memory_space<vmem>>, vector<2x32xf32>
    tpu.vector_store %arg8[%c0_5, %c0_6], %6 {strides = array<i32>} : memref<2x32xf32, #tpu.memory_space<vmem>>, vector<2x32xf32>,
    %c1_i32 = arith.constant 1 : i32
    %8 = arith.cmpi eq, %arg1, %c1_i32 : i32
    %9 = arith.extui %8 : i1 to i32
    %c0_i32_7 = arith.constant 0 : i32
    %10 = arith.cmpi ne, %9, %c0_i32_7 : i32
    scf.if %10 {
      %c0_8 = arith.constant 0 : index
      %c0_9 = arith.constant 0 : index
      %11 = vector.load %arg8[%c0_8, %c0_9] : memref<2x32xf32, #tpu.memory_space<vmem>>, vector<2x32xf32>
      %cst_10 = arith.constant 3.906250e-03 : f32
      %12 = vector.broadcast %cst_10 : f32 to vector<2x32xf32>
      %13 = arith.mulf %11, %12 : vector<2x32xf32>
      %c0_11 = arith.constant 0 : index
      %c0_12 = arith.constant 0 : index
      %14 = vector.load %arg3[%c0_11, %c0_12] : memref<32x128xf32, #tpu.memory_space<vmem>>, vector<32x128xf32>
      %cst_13 = arith.constant dense<0.000000e+00> : vector<2x128xf32>
      %15 = tpu.matmul %13, %14, %cst_13 {dimension_numbers = #tpu.dot_dimension_numbers<[1], [0], [0], [1], [0, 0, 1, 1], [], []>} : vector<2x32xf32>, vector<32x128xf32>, vector<2x128xf32> -> vector<2x128xf32>
      %c0_14 = arith.constant 0 : index
      %c0_15 = arith.constant 0 : index
      %16 = vector.load %arg6[%c0_14, %c0_15] : memref<2x128xf32, #tpu.memory_space<vmem>>, vector<2x128xf32>
      tpu.vector_store %arg6[%c0_14, %c0_15], %15 {strides = array<i32>} : memref<2x128xf32, #tpu.memory_space<vmem>>, vector<2x128xf32>,
      %c0_16 = arith.constant 0 : index
      %c0_17 = arith.constant 0 : index
      %17 = vector.load %arg4[%c0_16, %c0_17] : memref<128x128xf32, #tpu.memory_space<vmem>>, vector<128x128xf32>
      %cst_18 = arith.constant dense<0.000000e+00> : vector<2x128xf32>
      %18 = tpu.matmul %15, %17, %cst_18 {dimension_numbers = #tpu.dot_dimension_numbers<[1], [0], [0], [1], [0, 0, 1, 1], [], []>} : vector<2x128xf32>, vector<128x128xf32>, vector<2x128xf32> -> vector<2x128xf32>
      %c0_19 = arith.constant 0 : index
      %c0_20 = arith.constant 0 : index
      %19 = vector.load %arg5[%c0_19, %c0_20] : memref<1x128xf32, #tpu.memory_space<vmem>>, vector<1x128xf32>
      %20 = vector.broadcast %19 : vector<1x128xf32> to vector<2x128xf32>
      %21 = arith.addf %18, %20 : vector<2x128xf32>
      %c0_21 = arith.constant 0 : index
      %c0_22 = arith.constant 0 : index
      %22 = vector.load %arg7[%c0_21, %c0_22] : memref<2x128xf32, #tpu.memory_space<vmem>>, vector<2x128xf32>
      tpu.vector_store %arg7[%c0_21, %c0_22], %21 {strides = array<i32>} : memref<2x128xf32, #tpu.memory_space<vmem>>, vector<2x128xf32>,
    } else {
    }
    return
  }
  func.func @transform_0(%arg0: i32, %arg1: i32) -> (i32, i32, i32) {
    %c0_i32 = arith.constant 0 : i32
    %c0_i32_0 = arith.constant 0 : i32
    return %arg0, %c0_i32, %arg1 : i32, i32, i32
  }
  func.func @transform_1(%arg0: i32, %arg1: i32) -> (i32, i32) {
    %c0_i32 = arith.constant 0 : i32
    %c0_i32_0 = arith.constant 0 : i32
    %c0_i32_1 = arith.constant 0 : i32
    return %c0_i32, %c0_i32_0 : i32, i32
  }
  func.func @transform_2(%arg0: i32, %arg1: i32) -> (i32, i32) {
    %c0_i32 = arith.constant 0 : i32
    %c0_i32_0 = arith.constant 0 : i32
    %c0_i32_1 = arith.constant 0 : i32
    return %c0_i32, %c0_i32_0 : i32, i32
  }
  func.func @transform_3(%arg0: i32, %arg1: i32) -> (i32, i32) {
    %c0_i32 = arith.constant 0 : i32
    %c0_i32_0 = arith.constant 0 : i32
    %c0_i32_1 = arith.constant 0 : i32
    return %c0_i32, %c0_i32_0 : i32, i32
  }
  func.func @transform_4(%arg0: i32, %arg1: i32) -> (i32, i32) {
    %c0_i32 = arith.constant 0 : i32
    %c0_i32_0 = arith.constant 0 : i32
    return %arg0, %c0_i32 : i32, i32
  }
  func.func @transform_5(%arg0: i32, %arg1: i32) -> (i32, i32) {
    %c0_i32 = arith.constant 0 : i32
    %c0_i32_0 = arith.constant 0 : i32
    return %arg0, %c0_i32 : i32, i32
  }
}

</mosaic_0001>

<llo_original>
// kernel: tpu_custom_call.1
$region0: #{tpu_custom_call.1}
  #allocation0 [shape = 'u32[]', space=smem, size = 0x4, offset = 0x4, fixed_abs, tag = 'smem constant byte address 0x4 - core index']
  #allocation1 [shape = 'u32[72,128]{1,0:T(1,128)}', space=vmem, size = 0x9000, scoped, tag = 'internal scratch']
  #allocation2 [shape = 'f32[2,32]{1,0:T(2,128)}', space=vmem, size = 0x400, scoped, tag = 'scratch operand']
  %s0 = inlined_call_operand.hbm [shape: f32[2,32,256], index: 0, kind: input, shape index: {}]
  %s1 = inlined_call_operand.hbm [shape: f32[32,128], index: 1, kind: input, shape index: {}]
  %s2 = inlined_call_operand.hbm [shape: f32[128,128], index: 2, kind: input, shape index: {}]
  %s3 = inlined_call_operand.vmem [shape: f32[1,128], index: 3, kind: input, shape index: {}]
  %s4 = inlined_call_operand.hbm [shape: f32[2,128], index: 4, kind: output, shape index: {0}]
  %s5 = inlined_call_operand.hbm [shape: f32[2,128], index: 5, kind: output, shape index: {1}]
  %6 = xla_tuple %s4, %s5
  %s7 = sld [smem:[#allocation0]]
  $region77: #{tpu_custom_call.1} parent=0
    _
  %s9 = ssub.s32 1, %s7
  %s10 = scalar_select 0, %s9, %s7
  $region1: #{tpu_custom_call.1} parent=0
    #allocation3 [shape = 'u8[65536]{0}', space=vmem, size = 0x10000, scoped, tag = 'input window, operand 0']
    #allocation4 [shape = 's32[2]{0}', space=sflag, size = 0x8, scoped, tag = 'scoped memory for tpu_custom_call.1']
    #allocation5 [shape = 's32[2]{0}', space=sflag, size = 0x8, scoped, tag = 'scoped memory for tpu_custom_call.1']
    #allocation6 [shape = 'u8[16384]{0}', space=vmem, size = 0x4000, scoped, tag = 'input window, operand 1, single buffered']
    #allocation7 [shape = 's32[1]{0}', space=sflag, size = 0x4, scoped, tag = 'scoped memory for tpu_custom_call.1']
    #allocation8 [shape = 'u8[65536]{0}', space=vmem, size = 0x10000, scoped, tag = 'input window, operand 2, single buffered']
    #allocation9 [shape = 'u8[1024]{0}', space=vmem, size = 0x400, scoped, tag = 'output window, operand 0, single buffered']
    #allocation10 [shape = 'u8[1024]{0}', space=vmem, size = 0x400, scoped, tag = 'output window, operand 1, single buffered']
    #allocation11 [shape = 's32[1]{0}', space=sflag, size = 0x4, scoped, tag = 'scoped memory for tpu_custom_call.1']
    %11 = vsyncpa [#allocation4], 0
    %s12 = scalar_lea.sflag [#allocation4], 1
    %13 = vsyncpa %s12, 0
    %14 = vsyncpa [#allocation7], 0
    %15 = vsyncpa [#allocation5], 0
    %16 = vsyncpa [#allocation11], 0
    loop: start=0, step=1, limit=4
    $region2: #{tpu_custom_call.1} parent=1 // loop_pre_header
      _
    $region3: #{tpu_custom_call.1} parent=1 // loop_header
      %s18 = sphi 0, %s22
      %p19 = scmp.ge.s32.totalorder %s18, 4
      %s25 = sphi 0, %s37
      %s26 = sphi 0, %s33
      %s27 = sphi 0, %s25
      %s28 = sphi 0, %s26
      %s29 = sphi 0, %s27
      %s30 = sphi 0, %s28
      %s42 = sphi 0, %s44
      %s45 = sphi 0, %s42
      %s46 = sphi 0, %s45
      %s62 = sphi 0, %s46
      %s66 = sphi 0, %s66
      %s68 = sphi 0, %s66
      %s69 = sphi 0, %s68
      %s83 = sphi 0, %s69
      %s87 = sphi 0, %s87
      %s89 = sphi 0, %s87
      %s90 = sphi 0, %s89
      %s104 = sphi 0, %s90
      %s108 = sphi 0, %s108
      %s110 = sphi 0, %s108
      %s111 = sphi 0, %s110
      %s125 = sphi 0, %s111
      %s131 = sphi 0, %s133
      %s134 = sphi 0, %s131
      %s135 = sphi 0, %s134
      %s151 = sphi 0, %s135
      %s157 = sphi 0, %s159
      %s160 = sphi 0, %s157
      %s161 = sphi 0, %s160
      %s177 = sphi 0, %s161
    $region4: #{tpu_custom_call.1} parent=1 // loop_header_branch
      %21 = sbr.rel (%p19) target = $region8
    $region5: #{tpu_custom_call.1} parent=1 // loop_body
      %s23 = ssub.s32 %s18, 1
      %s24 = ssub.s32 %s18, 2
      %s31 = sadd.s32 1, %s26
      %p32 = scmp.ge.s32.totalorder %s31, 2
      %s33 = scalar_select %p32, 0, %s31
      %s34 = sadd.s32 1, %s25
      %s35 = scalar_select %p32, %s34, %s25
      %p36 = scmp.ge.s32.totalorder %s35, 1
      %s37 = scalar_select %p36, 0, %s35
      %s38 = ssub.s32 %s25, %s37
      %s39 = ssub.s32 %s26, %s33
      %s40 = sor.u32 %s38, %s39
      %p41 = scmp.eq.s32.totalorder %s40, 0
      %s43 = sadd.s32 %s42, 1
      %s44 = scalar_select %p41, %s42, %s43
      %p47 = pneg %p41
      %p48 = scmp.eq.s32.totalorder %s18, 1
      %p49 = por %p47, %p48
      %p50 = scmp.ne.s32.totalorder %s42, %s45
      %p51 = scmp.eq.s32.totalorder %s18, 0
      %p52 = por %p50, %p51
      %p53 = scmp.ne.s32.totalorder %s42, %s45
      %p54 = scmp.eq.s32.totalorder %s23, 1
      %p55 = por %p53, %p54
      %p56 = scmp.ne.s32.totalorder %s45, %s46
      %p57 = scmp.eq.s32.totalorder %s23, 0
      %p58 = por %p56, %p57
      %p59 = scmp.ne.s32.totalorder %s45, %s46
      %p60 = scmp.eq.s32.totalorder %s24, 1
      %p61 = por %p59, %p60
      %p63 = scmp.ne.s32.totalorder %s46, %s62
      %p64 = scmp.eq.s32.totalorder %s24, 0
      %p65 = por %p63, %p64
      %s67 = sadd.s32 %s66, 1
      %p70 = scmp.eq.s32.totalorder %s18, 1
      %p71 = scmp.ne.s32.totalorder %s66, %s68
      %p72 = scmp.eq.s32.totalorder %s18, 0
      %p73 = por %p71, %p72
      %p74 = scmp.ne.s32.totalorder %s66, %s68
      %p75 = scmp.eq.s32.totalorder %s23, 1
      %p76 = por %p74, %p75
      %p77 = scmp.ne.s32.totalorder %s68, %s69
      %p78 = scmp.eq.s32.totalorder %s23, 0
      %p79 = por %p77, %p78
      %p80 = scmp.ne.s32.totalorder %s68, %s69
      %p81 = scmp.eq.s32.totalorder %s24, 1
      %p82 = por %p80, %p81
      %p84 = scmp.ne.s32.totalorder %s69, %s83
      %p85 = scmp.eq.s32.totalorder %s24, 0
      %p86 = por %p84, %p85
      %s88 = sadd.s32 %s87, 1
      %p91 = scmp.eq.s32.totalorder %s18, 1
      %p92 = scmp.ne.s32.totalorder %s87, %s89
      %p93 = scmp.eq.s32.totalorder %s18, 0
      %p94 = por %p92, %p93
      %p95 = scmp.ne.s32.totalorder %s87, %s89
      %p96 = scmp.eq.s32.totalorder %s23, 1
      %p97 = por %p95, %p96
      %p98 = scmp.ne.s32.totalorder %s89, %s90
      %p99 = scmp.eq.s32.totalorder %s23, 0
      %p100 = por %p98, %p99
      %p101 = scmp.ne.s32.totalorder %s89, %s90
      %p102 = scmp.eq.s32.totalorder %s24, 1
      %p103 = por %p101, %p102
      %p105 = scmp.ne.s32.totalorder %s90, %s104
      %p106 = scmp.eq.s32.totalorder %s24, 0
      %p107 = por %p105, %p106
      %s109 = sadd.s32 %s108, 1
      %p112 = scmp.eq.s32.totalorder %s18, 1
      %p113 = scmp.ne.s32.totalorder %s108, %s110
      %p114 = scmp.eq.s32.totalorder %s18, 0
      %p115 = por %p113, %p114
      %p116 = scmp.ne.s32.totalorder %s108, %s110
      %p117 = scmp.eq.s32.totalorder %s23, 1
      %p118 = por %p116, %p117
      %p119 = scmp.ne.s32.totalorder %s110, %s111
      %p120 = scmp.eq.s32.totalorder %s23, 0
      %p121 = por %p119, %p120
      %p122 = scmp.ne.s32.totalorder %s110, %s111
      %p123 = scmp.eq.s32.totalorder %s24, 1
      %p124 = por %p122, %p123
      %p126 = scmp.ne.s32.totalorder %s111, %s125
      %p127 = scmp.eq.s32.totalorder %s24, 0
      %p128 = por %p126, %p127
      %s129 = ssub.s32 %s25, %s37
      %p130 = scmp.eq.s32.totalorder %s129, 0
      %s132 = sadd.s32 %s131, 1
      %s133 = scalar_select %p130, %s131, %s132
      %p136 = pneg %p130
      %p137 = scmp.eq.s32.totalorder %s18, 1
      %p138 = por %p136, %p137
      %p139 = scmp.ne.s32.totalorder %s131, %s134
      %p140 = scmp.eq.s32.totalorder %s18, 0
      %p141 = por %p139, %p140
      %p142 = scmp.ne.s32.totalorder %s131, %s134
      %p143 = scmp.eq.s32.totalorder %s23, 1
      %p144 = por %p142, %p143
      %p145 = scmp.ne.s32.totalorder %s134, %s135
      %p146 = scmp.eq.s32.totalorder %s23, 0
      %p147 = por %p145, %p146
      %p148 = scmp.ne.s32.totalorder %s134, %s135
      %p149 = scmp.eq.s32.totalorder %s24, 1
      %p150 = por %p148, %p149
      %p152 = scmp.ne.s32.totalorder %s135, %s151
      %p153 = scmp.eq.s32.totalorder %s24, 0
      %p154 = por %p152, %p153
      %s155 = ssub.s32 %s25, %s37
      %p156 = scmp.eq.s32.totalorder %s155, 0
      %s158 = sadd.s32 %s157, 1
      %s159 = scalar_select %p156, %s157, %s158
      %p162 = pneg %p156
      %p163 = scmp.eq.s32.totalorder %s18, 1
      %p164 = por %p162, %p163
      %p165 = scmp.ne.s32.totalorder %s157, %s160
      %p166 = scmp.eq.s32.totalorder %s18, 0
      %p167 = por %p165, %p166
      %p168 = scmp.ne.s32.totalorder %s157, %s160
      %p169 = scmp.eq.s32.totalorder %s23, 1
      %p170 = por %p168, %p169
      %p171 = scmp.ne.s32.totalorder %s160, %s161
      %p172 = scmp.eq.s32.totalorder %s23, 0
      %p173 = por %p171, %p172
      %p174 = scmp.ne.s32.totalorder %s160, %s161
      %p175 = scmp.eq.s32.totalorder %s24, 1
      %p176 = por %p174, %p175
      %p178 = scmp.ne.s32.totalorder %s161, %s177
      %p179 = scmp.eq.s32.totalorder %s24, 0
      %p180 = por %p178, %p179
      %p181 = scmp.le.s32.totalorder 1, %s18
      %p182 = scmp.lt.s32.totalorder %s18, 3
      %p183 = pnand %p181, %p182
      %p184 = pneg %p183
      // Predicated region
      $region9: #{tpu_custom_call.1} parent=5 // pred_check
        _
      $region10: #{tpu_custom_call.1} parent=5 // pred_check_branch
        %186 = sbr.rel (%p183) target = $region12
      $region11: #{tpu_custom_call.1} parent=5 // pred_region
        %s187 = ssub.s32 %s18, 1
        // Predicated region
        $region13: #{tpu_custom_call.1} parent=11 // pred_check
          %p188 = pneg %p79
        $region14: #{tpu_custom_call.1} parent=11 // pred_check_branch
          %190 = sbr.rel (%p188) target = $region16
        $region15: #{tpu_custom_call.1} parent=11 // pred_region
          %192 = vsyncadd [#allocation7], 0
          %s193 = sshll.u32 %s1, 4
          %s194 = int_to_ptr.hbm [resolvable:$true] %s193
          %s195 = sshll.u32 [#allocation6], 4
          %s196 = int_to_ptr.vmem [resolvable:$true] %s195
          %201 = dma.hbm_to_vmem [thread:$0]  %s194, 512, %s196, [#allocation7], 128, 128, 8
        $region16: #{tpu_custom_call.1} parent=11 // pred_fallthru
          _
        // Predicated region
        $region17: #{tpu_custom_call.1} parent=11 // pred_check
          %p202 = pneg %p100
        $region18: #{tpu_custom_call.1} parent=11 // pred_check_branch
          %204 = sbr.rel (%p202) target = $region20
        $region19: #{tpu_custom_call.1} parent=11 // pred_region
          %206 = vsyncadd [#allocation7], 0
          %s207 = sshll.u32 %s2, 4
          %s208 = int_to_ptr.hbm [resolvable:$true] %s207
          %s209 = sshll.u32 [#allocation8], 4
          %s210 = int_to_ptr.vmem [resolvable:$true] %s209
          %215 = dma.hbm_to_vmem [thread:$0]  %s208, 2048, %s210, [#allocation7], 128, 128, 8
        $region20: #{tpu_custom_call.1} parent=11 // pred_fallthru
          _
        // Predicated region
        $region21: #{tpu_custom_call.1} parent=11 // pred_check
          %p216 = pneg %p121
        $region22: #{tpu_custom_call.1} parent=11 // pred_check_branch
          %218 = sbr.rel (%p216) target = $region24
        $region23: #{tpu_custom_call.1} parent=11 // pred_region
          _
        $region24: #{tpu_custom_call.1} parent=11 // pred_fallthru
          _
      $region12: #{tpu_custom_call.1} parent=5 // pred_fallthru
        _
      %p219 = scmp.lt.s32.totalorder %s18, 2
      // Predicated region
      $region25: #{tpu_custom_call.1} parent=5 // pred_check
        %p220 = pneg %p219
      $region26: #{tpu_custom_call.1} parent=5 // pred_check_branch
        %222 = sbr.rel (%p220) target = $region28
      $region27: #{tpu_custom_call.1} parent=5 // pred_region
        // Predicated region
        $region29: #{tpu_custom_call.1} parent=27 // pred_check
          %p223 = pneg %p52
        $region30: #{tpu_custom_call.1} parent=27 // pred_check_branch
          %225 = sbr.rel (%p223) target = $region32
        $region31: #{tpu_custom_call.1} parent=27 // pred_region
          %s226 = sand.u32 %s42, 1
          %s227 = scalar_lea.sflag [#allocation4], %s226
          %s228 = sand.u32 %s42, 1
          %s229 = smul.addr %s228, 64
          %s230 = scalar_lea.vmem [#allocation3], %s229
          %s231 = smul.u32 2, %s25
          %233 = vsyncadd %s227, 0
          %s234 = smul.addr %s231, 8
          %s235 = sadd.s32 %s26, %s234
          %s236 = smul.addr %s235, 8
          %s237 = scalar_lea.hbm %s0, %s236
          %s238 = sshll.u32 %s237, 4
          %s239 = int_to_ptr.hbm [resolvable:$true] %s238
          %s240 = sshll.u32 %s230, 4
          %s241 = int_to_ptr.vmem [resolvable:$true] %s240
          %246 = dma.hbm_to_vmem [thread:$0]  %s239, 1024, %s241, %s227, 256, 128, 8
        $region32: #{tpu_custom_call.1} parent=27 // pred_fallthru
          _
      $region28: #{tpu_custom_call.1} parent=5 // pred_fallthru
        _
      %p247 = scmp.le.s32.totalorder 1, %s18
      %p248 = scmp.lt.s32.totalorder %s18, 3
      %p249 = pnand %p247, %p248
      %p250 = pneg %p249
      // Predicated region
      $region33: #{tpu_custom_call.1} parent=5 // pred_check
        _
      $region34: #{tpu_custom_call.1} parent=5 // pred_check_branch
        %252 = sbr.rel (%p249) target = $region36
      $region35: #{tpu_custom_call.1} parent=5 // pred_region
        %s253 = ssub.s32 %s18, 1
        %s254 = sand.u32 %s45, 1
        %s255 = scalar_lea.sflag [#allocation4], %s254
        %s256 = sand.u32 %s45, 1
        %s257 = smul.addr %s256, 64
        %s258 = scalar_lea.vmem [#allocation3], %s257
        // Predicated region
        $region37: #{tpu_custom_call.1} parent=35 // pred_check
          %p259 = pneg %p58
        $region38: #{tpu_custom_call.1} parent=35 // pred_check_branch
          %261 = sbr.rel (%p259) target = $region40
        $region39: #{tpu_custom_call.1} parent=35 // pred_region
          %263 = dma.done %s255, 1024
        $region40: #{tpu_custom_call.1} parent=35 // pred_fallthru
          _
        // Predicated region
        $region41: #{tpu_custom_call.1} parent=35 // pred_check
          %p264 = pneg %p79
        $region42: #{tpu_custom_call.1} parent=35 // pred_check_branch
          %266 = sbr.rel (%p264) target = $region44
        $region43: #{tpu_custom_call.1} parent=35 // pred_region
          %268 = dma.done [#allocation7], 512
        $region44: #{tpu_custom_call.1} parent=35 // pred_fallthru
          _
        // Predicated region
        $region45: #{tpu_custom_call.1} parent=35 // pred_check
          %p269 = pneg %p100
        $region46: #{tpu_custom_call.1} parent=35 // pred_check_branch
          %271 = sbr.rel (%p269) target = $region48
        $region47: #{tpu_custom_call.1} parent=35 // pred_region
          %273 = dma.done [#allocation7], 2048
        $region48: #{tpu_custom_call.1} parent=35 // pred_fallthru
          _
        %s274 = sand.u32 %s45, 1
        %s275 = scalar_lea.sflag [#allocation4], %s274
        %s276 = sand.u32 %s45, 1
        %s277 = smul.addr %s276, 64
        %s278 = scalar_lea.vmem [#allocation3], %s277
        %p279 = pneg %p58
        %p280 = pneg %p55
        %p281 = pneg %p79
        %p282 = pneg %p76
        %p283 = pneg %p100
        %p284 = pneg %p97
        %p285 = pneg %p121
        %p286 = pneg %p118
        %p287 = pneg %p147
        %p288 = pneg %p144
        %p289 = pneg %p173
        %p290 = pneg %p170
        %s291 = smul.u32 2, %s27
        %p292 = scmp.eq.s32.totalorder %s28, 0
        // Predicated region
        $region49: #{tpu_custom_call.1} parent=35 // pred_check
          %p293 = pneg %p292
        $region50: #{tpu_custom_call.1} parent=35 // pred_check_branch
          %295 = sbr.rel (%p293) target = $region52
        $region51: #{tpu_custom_call.1} parent=35 // pred_region
          %vm296 = vcmask 254976
          %297 = vst.msk [vmem:[#allocation2] sm:$0x3] %vm296, 0.0
        $region52: #{tpu_custom_call.1} parent=35 // pred_fallthru
          _
        %v298 = vld [vmem:[#allocation2] sm:$0x3]
        %v299 = vld [vmem:[%s258] sm:$0xff]
        %v300 = vld [vmem:[%s258 + $0x8] sm:$0xff]
        %v301 = vld [vmem:[%s258 + $0x10] sm:$0xff]
        %v302 = vld [vmem:[%s258 + $0x18] sm:$0xff]
        %v303 = vld [vmem:[%s258 + $0x20] sm:$0xff]
        %v304 = vld [vmem:[%s258 + $0x28] sm:$0xff]
        %v305 = vld [vmem:[%s258 + $0x30] sm:$0xff]
        %v306 = vld [vmem:[%s258 + $0x38] sm:$0xff]
        %307 = vadd.xlane.f32.xlu0 %v299
        %v308 = vpop.xlane.xlu0 %307
        %309 = vadd.xlane.f32.xlu0 %v300
        %v310 = vpop.xlane.xlu0 %309
        %311 = vadd.xlane.f32.xlu0 %v301
        %v312 = vpop.xlane.xlu0 %311
        %313 = vadd.xlane.f32.xlu0 %v302
        %v314 = vpop.xlane.xlu0 %313
        %315 = vadd.xlane.f32.xlu0 %v303
        %v316 = vpop.xlane.xlu0 %315
        %317 = vadd.xlane.f32.xlu0 %v304
        %v318 = vpop.xlane.xlu0 %317
        %319 = vadd.xlane.f32.xlu0 %v305
        %v320 = vpop.xlane.xlu0 %319
        %321 = vadd.xlane.f32.xlu0 %v306
        %v322 = vpop.xlane.xlu0 %321
        %v331 = vlaneseq
        %v332 = vand.u32 %v331, 127
        %v333 = vperm.slane %v308, %v332
        %v334 = vadd.s32 %v332, 4294967288
        %v335 = vperm.slane %v310, %v334
        %vm336 = vcmask 130112
        %v337 = vsel %vm336, %v335, %v333
        %v338 = vadd.s32 %v332, 4294967280
        %v339 = vperm.slane %v312, %v338
        %vm340 = vcmask 195712
        %v341 = vsel %vm340, %v339, %v337
        %v342 = vadd.s32 %v332, 4294967272
        %v343 = vperm.slane %v314, %v342
        %vm344 = vcmask 261312
        %v345 = vsel %vm344, %v343, %v341
        %v346 = vperm.slane %v316, %v332
        %v347 = vperm.slane %v318, %v334
        %v348 = vsel %vm336, %v347, %v346
        %v349 = vperm.slane %v320, %v338
        %v350 = vsel %vm340, %v349, %v348
        %v351 = vperm.slane %v322, %v342
        %v352 = vsel %vm344, %v351, %v350
        %vm353 = vcmask 1041409
        %v354 = vsel %vm353, %v352, %v345
        %v356 = vadd.f32 %v298, %v354
        %vm357 = vcmask 254976
        %358 = vst.msk [vmem:[#allocation2] sm:$0x3] %vm357, %v356
        %p359 = scmp.eq.s32.totalorder %s28, 1
        // Predicated region
        $region53: #{tpu_custom_call.1} parent=35 // pred_check
          %p360 = pneg %p359
        $region54: #{tpu_custom_call.1} parent=35 // pred_check_branch
          %362 = sbr.rel (%p360) target = $region56
        $region55: #{tpu_custom_call.1} parent=35 // pred_region
          %v363 = vld [vmem:[#allocation2] sm:$0x3]
          %v364 = vmul.f32 %v363, 0.00390625
          %v365 = vld [vmem:[#allocation6] sm:$0xff]
          %v366 = vld [vmem:[#allocation6 + $0x8] sm:$0xff]
          %v367 = vld [vmem:[#allocation6 + $0x10] sm:$0xff]
          %v368 = vld [vmem:[#allocation6 + $0x18] sm:$0xff]
          %vm369 = vcmask 261120
          %v371 = vsel %vm369, %v364, 0
          %373 = vmatpush.msra.mxu0 0.0
          %374 = vmatpush.msra.mxu0 0.0
          %375 = vmatpush.msra.mxu0 0.0
          %376 = vmatpush.msra.mxu0 0.0
          %377 = vmatpush.msra.mxu0 0.0
          %378 = vmatpush.msra.mxu0 0.0
          %379 = vmatpush.msra.mxu0 0.0
          %380 = vmatpush.msra.mxu0 0.0
          %381 = vmatpush.msra.mxu0 0.0
          %382 = vmatpush.msra.mxu0 0.0
          %383 = vmatpush.msra.mxu0 0.0
          %384 = vmatpush.msra.mxu0 0.0
          %385 = vmatpush.msra.mxu0 %v368
          %386 = vmatpush.msra.mxu0 %v367
          %387 = vmatpush.msra.mxu0 %v366
          %388 = vmatpush.msra.mxu0 %v365
          %389 = vmatmul.f32.gmra.mxu0 %v371
          %v390 = vpop.f32.mrf.mxu0
          %v391 = vadd.f32 0.0, %v390
          %392 = vdwg.mxu0
          %393 = vst [vmem:[#allocation9] sm:$0x3] %v391
          %v394 = vld [vmem:[#allocation8] sm:$0xff]
          %v395 = vld [vmem:[#allocation8 + $0x8] sm:$0xff]
          %v396 = vld [vmem:[#allocation8 + $0x10] sm:$0xff]
          %v397 = vld [vmem:[#allocation8 + $0x18] sm:$0xff]
          %v398 = vld [vmem:[#allocation8 + $0x20] sm:$0xff]
          %v399 = vld [vmem:[#allocation8 + $0x28] sm:$0xff]
          %v400 = vld [vmem:[#allocation8 + $0x30] sm:$0xff]
          %v401 = vld [vmem:[#allocation8 + $0x38] sm:$0xff]
          %v402 = vld [vmem:[#allocation8 + $0x40] sm:$0xff]
          %v403 = vld [vmem:[#allocation8 + $0x48] sm:$0xff]
          %v404 = vld [vmem:[#allocation8 + $0x50] sm:$0xff]
          %v405 = vld [vmem:[#allocation8 + $0x58] sm:$0xff]
          %v406 = vld [vmem:[#allocation8 + $0x60] sm:$0xff]
          %v407 = vld [vmem:[#allocation8 + $0x68] sm:$0xff]
          %v408 = vld [vmem:[#allocation8 + $0x70] sm:$0xff]
          %v409 = vld [vmem:[#allocation8 + $0x78] sm:$0xff]
          %v410 = vld [vmem:[%s3] sm:$0x1]
          %v412 = vperm.slane %v410, 0
          %414 = vmatpush.msra.mxu0 %v409
          %415 = vmatpush.msra.mxu0 %v408
          %416 = vmatpush.msra.mxu0 %v407
          %417 = vmatpush.msra.mxu0 %v406
          %418 = vmatpush.msra.mxu0 %v405
          %419 = vmatpush.msra.mxu0 %v404
          %420 = vmatpush.msra.mxu0 %v403
          %421 = vmatpush.msra.mxu0 %v402
          %422 = vmatpush.msra.mxu0 %v401
          %423 = vmatpush.msra.mxu0 %v400
          %424 = vmatpush.msra.mxu0 %v399
          %425 = vmatpush.msra.mxu0 %v398
          %426 = vmatpush.msra.mxu0 %v397
          %427 = vmatpush.msra.mxu0 %v396
          %428 = vmatpush.msra.mxu0 %v395
          %429 = vmatpush.msra.mxu0 %v394
          %430 = vmatmul.f32.gmra.mxu0 %v391
          %v431 = vpop.f32.mrf.mxu0
          %v432 = vadd.f32 %v412, %v431
          %433 = vdwg.mxu0
          %434 = vst [vmem:[#allocation10] sm:$0x3] %v432
        $region56: #{tpu_custom_call.1} parent=35 // pred_fallthru
          _
        // Predicated region
        $region57: #{tpu_custom_call.1} parent=35 // pred_check
          %p435 = pneg %p144
        $region58: #{tpu_custom_call.1} parent=35 // pred_check_branch
          %437 = sbr.rel (%p435) target = $region60
        $region59: #{tpu_custom_call.1} parent=35 // pred_region
          %439 = vsyncadd [#allocation5], 0
          %s440 = smul.addr %s27, 2
          %s441 = scalar_lea.hbm %s4, %s440
          %s443 = sshll.u32 [#allocation9], 4
          %s444 = int_to_ptr.vmem [resolvable:$true] %s443
          %s445 = sshll.u32 %s441, 4
          %s446 = int_to_ptr.hbm [resolvable:$true] %s445
          %448 = dma.vmem_to_hbm [thread:$0]  %s444, 32, %s446, [#allocation5]
        $region60: #{tpu_custom_call.1} parent=35 // pred_fallthru
          _
        // Predicated region
        $region61: #{tpu_custom_call.1} parent=35 // pred_check
          %p449 = pneg %p170
        $region62: #{tpu_custom_call.1} parent=35 // pred_check_branch
          %451 = sbr.rel (%p449) target = $region64
        $region63: #{tpu_custom_call.1} parent=35 // pred_region
          %453 = vsyncadd [#allocation11], 0
          %s454 = smul.addr %s27, 2
          %s455 = scalar_lea.hbm %s5, %s454
          %s457 = sshll.u32 [#allocation10], 4
          %s458 = int_to_ptr.vmem [resolvable:$true] %s457
          %s459 = sshll.u32 %s455, 4
          %s460 = int_to_ptr.hbm [resolvable:$true] %s459
          %462 = dma.vmem_to_hbm [thread:$0]  %s458, 32, %s460, [#allocation11]
        $region64: #{tpu_custom_call.1} parent=35 // pred_fallthru
          _
        // Predicated region
        $region65: #{tpu_custom_call.1} parent=35 // pred_check
          %p463 = pneg %p144
        $region66: #{tpu_custom_call.1} parent=35 // pred_check_branch
          %465 = sbr.rel (%p463) target = $region68
        $region67: #{tpu_custom_call.1} parent=35 // pred_region
          %467 = dma.done [#allocation5], 32
        $region68: #{tpu_custom_call.1} parent=35 // pred_fallthru
          _
        // Predicated region
        $region69: #{tpu_custom_call.1} parent=35 // pred_check
          %p468 = pneg %p170
        $region70: #{tpu_custom_call.1} parent=35 // pred_check_branch
          %470 = sbr.rel (%p468) target = $region72
        $region71: #{tpu_custom_call.1} parent=35 // pred_region
          %472 = dma.done [#allocation11], 32
        $region72: #{tpu_custom_call.1} parent=35 // pred_fallthru
          _
      $region36: #{tpu_custom_call.1} parent=5 // pred_fallthru
        _
      %p473 = scmp.le.s32.totalorder 2, %s18
      // Predicated region
      $region73: #{tpu_custom_call.1} parent=5 // pred_check
        %p474 = pneg %p473
      $region74: #{tpu_custom_call.1} parent=5 // pred_check_branch
        %476 = sbr.rel (%p474) target = $region76
      $region75: #{tpu_custom_call.1} parent=5 // pred_region
        %s477 = ssub.s32 %s18, 2
      $region76: #{tpu_custom_call.1} parent=5 // pred_fallthru
        _
    $region6: #{tpu_custom_call.1} parent=1 // loop_footer
      %s22 = sadd.s32 1, %s18
    $region7: #{tpu_custom_call.1} parent=1 // loop_footer_branch
      %17 = sbr.rel target = $region3
    $region8: #{tpu_custom_call.1} parent=1 // loop_exit
      _
    %478 = vsyncpa [#allocation4], 1
    %s479 = scalar_lea.sflag [#allocation4], 1
    %480 = vsyncpa %s479, 1
    %481 = vsyncpa [#allocation7], 1
    %482 = vsyncpa [#allocation5], 1
    %s483 = scalar_lea.sflag [#allocation5], 1
    %484 = vsyncpa %s483, 1
    %485 = vsyncpa [#allocation11], 1

</llo_original>
